<compile_context>
chip_gen: v6e
topology: v6e:2x2x1
jax: 0.10.0
libtpu: 0.0.40
codegen_flags: <defaults>
</compile_context>

<pallas_src>
import functools
import math

import jax
import jax.numpy as jnp
from jax.experimental import pallas as pl
from jax.experimental.pallas import tpu as pltpu

LN_EPS = 1e-5


def _solu_ln_kernel(x_ref, gamma_ref, beta_ref, o_ref, *, inv_d):
    # x_ref: (TR, D) tile of rows; gamma/beta: (1, D) f32 (pre-cast in wrapper).
    x = x_ref[...].astype(jnp.float32)

    # --- SoLU: x * softmax(x, axis=-1) (max-subtracted, f32) ---
    m = jnp.max(x, axis=-1, keepdims=True)
    e = jnp.exp(x - m)
    denom = jnp.sum(e, axis=-1, keepdims=True)
    # exact reciprocal: keeps the 1e-5 accuracy budget of the reference
    s = x * e * pl.reciprocal(denom, approx=False)

    # --- LayerNorm over features, fused single pass (sum & sum of squares) ---
    s_sum = jnp.sum(s, axis=-1, keepdims=True)
    ss_sum = jnp.sum(s * s, axis=-1, keepdims=True)
    mu = s_sum * inv_d
    var = ss_sum * inv_d - mu * mu
    y = (s - mu) * jax.lax.rsqrt(var + LN_EPS)

    o_ref[...] = (y * gamma_ref[...] + beta_ref[...]).astype(o_ref.dtype)


def _vmem_limit_bytes():
    """Scoped-VMEM limit: ~3/4 of physical, capped at 100 MiB.

    v5e/v6e (128 MiB physical) -> 96 MiB; v7x (64 MiB physical) -> 48 MiB.
    """
    try:
        cap = pltpu.get_tpu_info().vmem_capacity_bytes
    except Exception:
        cap = 64 * 1024 * 1024  # conservative fallback (v7x per-TC VMEM)
    return min(int(cap) * 3 // 4, 100 * 1024 * 1024)


def _pick_row_tile(rows, d, dtype, vmem_budget):
    """Largest sublane-aligned row tile whose working set fits the budget."""
    itemsize = jnp.dtype(dtype).itemsize
    # Sublane packing granularity: 8 for f32, 16 for bf16, 32 for int8/fp8.
    sublane = max(8, 32 // max(itemsize, 1))
    # Per-row VMEM cost: double-buffered input + output blocks (native dtype)
    # plus ~4 live (TR, D) f32 intermediates inside the kernel body.
    bytes_per_row = d * (4 * itemsize + 4 * 4)
    tile = (vmem_budget * 2 // 3) // max(bytes_per_row, 1)
    tile = min(tile, 1024)                               # diminishing returns
    tile = min(tile, pl.cdiv(rows, sublane) * sublane)   # don't exceed array
    tile = max(sublane, (tile // sublane) * sublane)
    return int(tile)


@functools.partial(jax.jit, static_argnames=("row_tile",))
def solu_ln(x, gamma, beta, *, row_tile=None):
    """Apply SoLULN along the last axis of x (any leading shape)."""
    orig_shape = x.shape
    d = orig_shape[-1]
    rows = math.prod(orig_shape[:-1]) if len(orig_shape) > 1 else 1

    x2 = x.reshape(rows, d)
    gamma2 = gamma.astype(jnp.float32).reshape(1, d)
    beta2 = beta.astype(jnp.float32).reshape(1, d)

    vmem_limit = _vmem_limit_bytes()
    if row_tile is None:
        row_tile = _pick_row_tile(rows, d, x.dtype, vmem_limit)

    # No host-side padding / slicing: the (possibly ragged) last row tile is
    # handled by Pallas' masked out-of-bounds block reads/writes, and rows are
    # fully independent so garbage in the OOB region is harmless.
    grid = (pl.cdiv(rows, row_tile),)

    out = pl.pallas_call(
        functools.partial(_solu_ln_kernel, inv_d=1.0 / d),
        out_shape=jax.ShapeDtypeStruct((rows, d), x.dtype),
        grid_spec=pltpu.PrefetchScalarGridSpec(
            num_scalar_prefetch=0,
            grid=grid,
            in_specs=[
                pl.BlockSpec((row_tile, d), lambda i: (i, 0)),
                pl.BlockSpec((1, d), lambda i: (0, 0)),
                pl.BlockSpec((1, d), lambda i: (0, 0)),
            ],
            out_specs=pl.BlockSpec((row_tile, d), lambda i: (i, 0)),
        ),
        compiler_params=pltpu.CompilerParams(
            # Single grid axis marked parallel: shards the row loop across the
            # 2 TensorCores on v7x; near-neutral (and harmless) on v5e/v6e.
            dimension_semantics=("parallel",),
            vmem_limit_bytes=vmem_limit,
        ),
    )(x2, gamma2, beta2)

    return out.reshape(orig_shape)


def _reference(x, gamma, beta):
    xf = x.astype(jnp.float32)
    sm = jax.nn.softmax(xf, axis=-1)
    s = xf * sm
    mu = jnp.mean(s, axis=-1, keepdims=True)
    var = jnp.mean((s - mu) ** 2, axis=-1, keepdims=True)
    y = (s - mu) / jnp.sqrt(var + LN_EPS)
    return (y * gamma.astype(jnp.float32) + beta.astype(jnp.float32)).astype(x.dtype)


if __name__ == "__main__":
    key = jax.random.PRNGKey(0)

    batch, seq, hidden = 2, 8, 32  # in_features = hidden = 32
    x = jax.random.normal(key, (batch, seq, hidden), dtype=jnp.float32)

    # nn.LayerNorm(in_features) default init: weight = ones, bias = zeros.
    gamma = jnp.ones((hidden,), dtype=jnp.float32)
    beta = jnp.zeros((hidden,), dtype=jnp.float32)

    out = solu_ln(x, gamma, beta)
    out = jax.block_until_ready(out)

    ref = _reference(x, gamma, beta)
    assert out.shape == x.shape and out.dtype == x.dtype
    assert jnp.allclose(out, ref, atol=1e-5, rtol=1e-5)

    # Exercise a ragged row count (not a multiple of the row tile) to cover
    # the masked OOB last-block path.
    x_odd = jax.random.normal(jax.random.PRNGKey(1), (3, 5, hidden), jnp.float32)
    out_odd = jax.block_until_ready(solu_ln(x_odd, gamma, beta))
    assert jnp.allclose(out_odd, _reference(x_odd, gamma, beta), atol=1e-5, rtol=1e-5)

    print("KERNEL_OK")
</pallas_src>

<mosaic_0001>
module attributes {stable_mosaic.version = 11 : i64} {
  func.func @_solu_ln_kernel(%arg0: i32, %arg1: memref<16x32xf32, #tpu.memory_space<vmem>>, %arg2: memref<1x32xf32, #tpu.memory_space<vmem>>, %arg3: memref<1x32xf32, #tpu.memory_space<vmem>>, %arg4: memref<16x32xf32, #tpu.memory_space<vmem>>) attributes {dimension_semantics = [#tpu.dimension_semantics<parallel>], iteration_bounds = array<i64: 1>, scalar_prefetch = 0 : i64, scratch_operands = 0 : i64, tpu.core_type = #tpu.core_type<tc>, window_params = [{transform_indices = @transform_0, window_bounds = array<i64: 16, 32>}, {pipeline_mode = #tpu.pipeline_mode<synchronous>, transform_indices = @transform_1, window_bounds = array<i64: 1, 32>}, {pipeline_mode = #tpu.pipeline_mode<synchronous>, transform_indices = @transform_2, window_bounds = array<i64: 1, 32>}, {transform_indices = @transform_3, window_bounds = array<i64: 16, 32>}]} {
    %c0 = arith.constant 0 : index
    %c0_0 = arith.constant 0 : index
    %0 = vector.load %arg1[%c0, %c0_0] : memref<16x32xf32, #tpu.memory_space<vmem>>, vector<16x32xf32>
    %cst = arith.constant dense<0xFF800000> : vector<16xf32>
    %1 = vector.multi_reduction <maximumf>, %0, %cst [1] : vector<16x32xf32> to vector<16xf32>
    %2 = vector.shape_cast %1 : vector<16xf32> to vector<16x1xf32>
    %3 = vector.broadcast %2 : vector<16x1xf32> to vector<16x32xf32>
    %4 = arith.subf %0, %3 : vector<16x32xf32>
    %5 = math.exp %4 : vector<16x32xf32>
    %cst_1 = arith.constant dense<0.000000e+00> : vector<16xf32>
    %6 = vector.multi_reduction <add>, %5, %cst_1 [1] : vector<16x32xf32> to vector<16xf32>
    %7 = vector.shape_cast %6 : vector<16xf32> to vector<16x1xf32>
    %8 = arith.mulf %0, %5 : vector<16x32xf32>
    %9 = tpu.reciprocal %7 : vector<16x1xf32> -> vector<16x1xf32>
    %10 = vector.broadcast %9 : vector<16x1xf32> to vector<16x32xf32>
    %11 = arith.mulf %8, %10 : vector<16x32xf32>
    %cst_2 = arith.constant dense<0.000000e+00> : vector<16xf32>
    %12 = vector.multi_reduction <add>, %11, %cst_2 [1] : vector<16x32xf32> to vector<16xf32>
    %13 = vector.shape_cast %12 : vector<16xf32> to vector<16x1xf32>
    %14 = arith.mulf %11, %11 : vector<16x32xf32>
    %cst_3 = arith.constant dense<0.000000e+00> : vector<16xf32>
    %15 = vector.multi_reduction <add>, %14, %cst_3 [1] : vector<16x32xf32> to vector<16xf32>
    %16 = vector.shape_cast %15 : vector<16xf32> to vector<16x1xf32>
    %cst_4 = arith.constant 3.125000e-02 : f32
    %17 = vector.broadcast %cst_4 : f32 to vector<16x1xf32>
    %18 = arith.mulf %13, %17 : vector<16x1xf32>
    %cst_5 = arith.constant 3.125000e-02 : f32
    %19 = vector.broadcast %cst_5 : f32 to vector<16x1xf32>
    %20 = arith.mulf %16, %19 : vector<16x1xf32>
    %21 = arith.mulf %18, %18 : vector<16x1xf32>
    %22 = arith.subf %20, %21 : vector<16x1xf32>
    %23 = vector.broadcast %18 : vector<16x1xf32> to vector<16x32xf32>
    %24 = arith.subf %11, %23 : vector<16x32xf32>
    %cst_6 = arith.constant 9.99999974E-6 : f32
    %25 = vector.broadcast %cst_6 : f32 to vector<16x1xf32>
    %26 = arith.addf %22, %25 : vector<16x1xf32>
    %27 = math.rsqrt %26 : vector<16x1xf32>
    %28 = vector.broadcast %27 : vector<16x1xf32> to vector<16x32xf32>
    %29 = arith.mulf %24, %28 : vector<16x32xf32>
    %c0_7 = arith.constant 0 : index
    %c0_8 = arith.constant 0 : index
    %30 = vector.load %arg2[%c0_7, %c0_8] : memref<1x32xf32, #tpu.memory_space<vmem>>, vector<1x32xf32>
    %31 = vector.broadcast %30 : vector<1x32xf32> to vector<16x32xf32>
    %32 = arith.mulf %29, %31 : vector<16x32xf32>
    %c0_9 = arith.constant 0 : index
    %c0_10 = arith.constant 0 : index
    %33 = vector.load %arg3[%c0_9, %c0_10] : memref<1x32xf32, #tpu.memory_space<vmem>>, vector<1x32xf32>
    %34 = vector.broadcast %33 : vector<1x32xf32> to vector<16x32xf32>
    %35 = arith.addf %32, %34 : vector<16x32xf32>
    %c0_11 = arith.constant 0 : index
    %c0_12 = arith.constant 0 : index
    %36 = vector.load %arg4[%c0_11, %c0_12] : memref<16x32xf32, #tpu.memory_space<vmem>>, vector<16x32xf32>
    tpu.vector_store %arg4[%c0_11, %c0_12], %35 {strides = array<i32>} : memref<16x32xf32, #tpu.memory_space<vmem>>, vector<16x32xf32>,
    return
  }
  func.func @transform_0(%arg0: i32) -> (i32, i32) {
    %c0_i32 = arith.constant 0 : i32
    %c0_i32_0 = arith.constant 0 : i32
    return %arg0, %c0_i32 : i32, i32
  }
  func.func @transform_1(%arg0: i32) -> (i32, i32) {
    %c0_i32 = arith.constant 0 : i32
    %c0_i32_0 = arith.constant 0 : i32
    %c0_i32_1 = arith.constant 0 : i32
    return %c0_i32, %c0_i32_0 : i32, i32
  }
  func.func @transform_2(%arg0: i32) -> (i32, i32) {
    %c0_i32 = arith.constant 0 : i32
    %c0_i32_0 = arith.constant 0 : i32
    %c0_i32_1 = arith.constant 0 : i32
    return %c0_i32, %c0_i32_0 : i32, i32
  }
  func.func @transform_3(%arg0: i32) -> (i32, i32) {
    %c0_i32 = arith.constant 0 : i32
    %c0_i32_0 = arith.constant 0 : i32
    return %arg0, %c0_i32 : i32, i32
  }
}

</mosaic_0001>

<llo_original>
// kernel: solu_ln.1
$region0: #{solu_ln.1}
  #allocation0 [shape = 'u32[]', space=smem, size = 0x4, offset = 0x4, fixed_abs, tag = 'smem constant byte address 0x4 - core index']
  #allocation1 [shape = 'u32[144,128]{1,0:T(1,128)}', space=vmem, size = 0x12000, scoped, tag = 'internal scratch']
  %s0 = inlined_call_operand.hbm [shape: f32[16,32], index: 0, kind: input, shape index: {}]
  %s1 = inlined_call_operand.vmem [shape: f32[1,32], index: 1, kind: input, shape index: {}]
  %s2 = inlined_call_operand.vmem [shape: f32[1,32], index: 2, kind: input, shape index: {}]
  %s3 = inlined_call_operand.hbm [shape: f32[16,32], index: 3, kind: output, shape index: {}]
  %s4 = sld [smem:[#allocation0]]
  $region26: #{solu_ln.1} parent=0
    _
  %s6 = ssub.s32 1, %s4
  %s7 = scalar_select 0, %s6, %s4
  $region1: #{solu_ln.1} parent=0
    #allocation2 [shape = 'u8[8192]{0}', space=vmem, size = 0x2000, scoped, tag = 'input window, operand 0, single buffered']
    #allocation3 [shape = 's32[1]{0}', space=sflag, size = 0x4, scoped, tag = 'scoped memory for solu_ln.1']
    #allocation4 [shape = 's32[1]{0}', space=sflag, size = 0x4, scoped, tag = 'scoped memory for solu_ln.1']
    #allocation5 [shape = 'u8[8192]{0}', space=vmem, size = 0x2000, scoped, tag = 'output window, operand 0, single buffered']
    %8 = vsyncpa [#allocation3], 0
    %9 = vsyncpa [#allocation4], 0
    // Predicated region
    $region2: #{solu_ln.1} parent=1 // pred_check
      _
    $region3: #{solu_ln.1} parent=1 // pred_check_branch
      %11 = sbr.rel (0) target = $region5
    $region4: #{solu_ln.1} parent=1 // pred_region
      %s13 = ssub.s32 256, 256
      %14 = vsyncadd [#allocation3], %s13
      %s15 = sshll.u32 [#allocation2], 4
      %s16 = int_to_ptr.vmem [resolvable:$true] %s15
      %21 = dma.hbm_to_vmem [thread:$0]  %s0, 256, %s16, [#allocation3], 128, 128, 8
    $region5: #{solu_ln.1} parent=1 // pred_fallthru
      _
    // Predicated region
    $region6: #{solu_ln.1} parent=1 // pred_check
      _
    $region7: #{solu_ln.1} parent=1 // pred_check_branch
      %23 = sbr.rel (0) target = $region9
    $region8: #{solu_ln.1} parent=1 // pred_region
      _
    $region9: #{solu_ln.1} parent=1 // pred_fallthru
      _
    // Predicated region
    $region10: #{solu_ln.1} parent=1 // pred_check
      _
    $region11: #{solu_ln.1} parent=1 // pred_check_branch
      %25 = sbr.rel (0) target = $region13
    $region12: #{solu_ln.1} parent=1 // pred_region
      _
    $region13: #{solu_ln.1} parent=1 // pred_fallthru
      _
    // Predicated region
    $region14: #{solu_ln.1} parent=1 // pred_check
      _
    $region15: #{solu_ln.1} parent=1 // pred_check_branch
      %27 = sbr.rel (0) target = $region17
    $region16: #{solu_ln.1} parent=1 // pred_region
      %28 = dma.done [#allocation3], 256
    $region17: #{solu_ln.1} parent=1 // pred_fallthru
      _
    %v29 = vld [vmem:[#allocation2] sm:$0xff]
    %v30 = vld [vmem:[#allocation2 + $0x8] sm:$0xff]
    %vm31 = vcmask 261120
    %v32 = vsel %vm31, %v29, -inf
    %33 = vmax.xlane.f32.xlu0 %v32
    %v34 = vpop.xlane.xlu0 %33
    %v35 = vsel %vm31, %v30, -inf
    %36 = vmax.xlane.f32.xlu0 %v35
    %v37 = vpop.xlane.xlu0 %36
    %v38 = vsub.f32 %v29, %v34
    %v39 = vsub.f32 %v30, %v37
    %v40 = vmul.f32 %v38, 1.442695
    %v41 = vpow.pop %v40
    %v42 = vmul.f32 %v39, 1.442695
    %v43 = vpow.pop %v42
    %v44 = vsel %vm31, %v41, 0.0
    %45 = vadd.xlane.f32.xlu0 %v44
    %v46 = vpop.xlane.xlu0 %45
    %v47 = vsel %vm31, %v43, 0.0
    %48 = vadd.xlane.f32.xlu0 %v47
    %v49 = vpop.xlane.xlu0 %48
    %v50 = vmul.f32 %v29, %v41
    %v51 = vmul.f32 %v30, %v43
    %v52 = vrcp.pop %v46
    %v53 = vrcp.pop %v49
    %v54 = vmul.f32 %v50, %v52
    %v55 = vmul.f32 %v51, %v53
    %v56 = vsel %vm31, %v54, 0.0
    %57 = vadd.xlane.f32.xlu0 %v56
    %v58 = vpop.xlane.xlu0 %57
    %v59 = vsel %vm31, %v55, 0.0
    %60 = vadd.xlane.f32.xlu0 %v59
    %v61 = vpop.xlane.xlu0 %60
    %v62 = vmul.f32 %v54, %v54
    %v63 = vmul.f32 %v55, %v55
    %v64 = vsel %vm31, %v62, 0.0
    %65 = vadd.xlane.f32.xlu0 %v64
    %v66 = vpop.xlane.xlu0 %65
    %v67 = vsel %vm31, %v63, 0.0
    %68 = vadd.xlane.f32.xlu0 %v67
    %v69 = vpop.xlane.xlu0 %68
    %v70 = vmul.f32 %v58, 0.03125
    %v71 = vmul.f32 %v61, 0.03125
    %v72 = vmul.f32 %v66, 0.03125
    %v73 = vmul.f32 %v69, 0.03125
    %v74 = vmul.f32 %v70, %v70
    %v75 = vmul.f32 %v71, %v71
    %v76 = vsub.f32 %v72, %v74
    %v77 = vsub.f32 %v73, %v75
    %v78 = vsub.f32 %v54, %v70
    %v79 = vsub.f32 %v55, %v71
    %v80 = vadd.f32 %v76, 1e-05
    %v81 = vadd.f32 %v77, 1e-05
    %v82 = vrsqrt.pop %v80
    %v83 = vrsqrt.pop %v81
    %v84 = vmul.f32 %v78, %v82
    %v85 = vmul.f32 %v79, %v83
    %v86 = vld [vmem:[%s1] sm:$0x1]
    %v88 = vlaneseq
    %v89 = vshrl.u32 %v88, 7
    %v90 = vsub.s32 0, %v89
    %v91 = vrot.slane %v86, %v90
    %v93 = vmul.f32 %v84, %v91
    %v94 = vmul.f32 %v85, %v91
    %v95 = vld [vmem:[%s2] sm:$0x1]
    %v97 = vlaneseq
    %v98 = vshrl.u32 %v97, 7
    %v99 = vsub.s32 0, %v98
    %v100 = vrot.slane %v95, %v99
    %v102 = vadd.f32 %v93, %v100
    %v103 = vadd.f32 %v94, %v100
    %104 = vst.msk [vmem:[#allocation5] sm:$0xff] %vm31, %v102
    %105 = vst.msk [vmem:[#allocation5 + $0x8] sm:$0xff] %vm31, %v103
    // Predicated region
    $region18: #{solu_ln.1} parent=1 // pred_check
      _
    $region19: #{solu_ln.1} parent=1 // pred_check_branch
      %107 = sbr.rel (0) target = $region21
    $region20: #{solu_ln.1} parent=1 // pred_region
      %s109 = ssub.s32 256, 256
      %110 = vsyncadd [#allocation4], %s109
      %s111 = sshll.u32 [#allocation5], 4
      %s112 = int_to_ptr.vmem [resolvable:$true] %s111
      %117 = dma.vmem_to_hbm [thread:$0]  %s112, 256, %s3, [#allocation4], 128, 128, 8
    $region21: #{solu_ln.1} parent=1 // pred_fallthru
      _
    // Predicated region
    $region22: #{solu_ln.1} parent=1 // pred_check
      _
    $region23: #{solu_ln.1} parent=1 // pred_check_branch
      %119 = sbr.rel (0) target = $region25
    $region24: #{solu_ln.1} parent=1 // pred_region
      %120 = dma.done [#allocation4], 256
    $region25: #{solu_ln.1} parent=1 // pred_fallthru
      _
    %121 = vsyncpa [#allocation3], 1
    %122 = vsyncpa [#allocation4], 1

</llo_original>
